<compile_context>
chip_gen: v7x
topology: tpu7x:2x2x1
jax: 0.10.0
libtpu: 0.0.40
codegen_flags: <defaults>
</compile_context>

<pallas_src>
import functools

import jax
import jax.numpy as jnp
from jax.experimental import pallas as pl
from jax.experimental.pallas import tpu as pltpu


# ----------------------------------------------------------------------------
# Sizing helpers
# ----------------------------------------------------------------------------

def _vmem_capacity_bytes():
    """Physical VMEM per TensorCore (chip-aware; conservative fallback)."""
    try:
        info = pltpu.get_tpu_info()
        cap = getattr(info, "vmem_capacity_bytes", None)
        if cap:
            return int(cap)
    except Exception:
        pass
    return 64 << 20  # v7x per-TC size; safe lower bound for v5e/v6e as well.


def _largest_divisor_leq(n, limit):
    best = 1
    for d in range(1, n + 1):
        if n % d == 0 and d <= limit:
            best = d
    return best


def _pick_batch_tile(B, per_sample_bytes, target_bytes, budget_cap):
    by_target = max(1, target_bytes // per_sample_bytes)
    by_budget = max(1, (budget_cap - (2 << 20)) // (4 * per_sample_bytes))
    bt = _largest_divisor_leq(B, min(B, by_target, by_budget))
    # Keep >= 2 grid steps whenever possible so dimension_semantics=("parallel",)
    # can shard across both TensorCores on v7x (no-op on single-TC v5e/v6e).
    if B // bt < 2 and B >= 2:
        bt = _largest_divisor_leq(B, max(1, B // 2))
    return bt


def _pad_se_weights(w1, w2):
    """Zero-pad the squeeze dim Cr up to a multiple of 128 (lane-dense matmuls).

    Extra w1 columns are zero (stay zero through ReLU) and the matching extra
    w2 rows are zero (contribute nothing) -> result is exact.
    """
    C, Cr = w1.shape
    Crp = ((Cr + 127) // 128) * 128
    if Crp == Cr:
        return w1, w2
    return (jnp.pad(w1, ((0, 0), (0, Crp - Cr))),
            jnp.pad(w2, ((0, Crp - Cr), (0, 0))))


# ----------------------------------------------------------------------------
# In-kernel lane sum (chunked VPU adds + one final XLU reduce)
# ----------------------------------------------------------------------------

def _lane_sum_f32(ref3, *, col0=None, n_valid=None):
    """Sum a (Bt, C, L) VMEM ref over its last (lane) axis in f32.

    Reads 128-lane chunks straight from the ref (short value live ranges, no
    whole-tile bind) and accumulates them with VPU adds into a (Bt, C, 128)
    f32 accumulator; a single final cross-lane (XLU) reduce finishes the sum.

    If `n_valid` is given, lanes whose global column index (col0 + j) >= n_valid
    are excluded (ragged last spatial tile in the two-pass reduce).
    """
    Bt, C, L = ref3.shape
    n_full, rem = divmod(L, 128)

    def load(start, size):
        v = ref3[:, :, pl.ds(start, size)].astype(jnp.float32)
        if n_valid is not None:
            col = col0 + start + jax.lax.broadcasted_iota(jnp.int32, v.shape, 2)
            v = jnp.where(col < n_valid, v, 0.0)
        return v

    parts = []
    if n_full > 0:
        if n_full <= 8:  # short fixed trip count: static unroll
            acc = load(0, 128)
            for i in range(1, n_full):
                acc = acc + load(i * 128, 128)
        else:
            def body(i, a):
                start = pl.multiple_of(i * 128, 128)
                return a + load(start, 128)
            acc = jax.lax.fori_loop(1, n_full, body, load(0, 128))
        parts.append(jnp.sum(acc, axis=-1))          # one 128-lane XLU reduce
    if rem > 0:
        parts.append(jnp.sum(load(n_full * 128, rem), axis=-1))
    total = parts[0]
    for p in parts[1:]:
        total = total + p
    return total  # (Bt, C) f32


# ----------------------------------------------------------------------------
# Kernels
# ----------------------------------------------------------------------------

def _ca_fused_kernel(x_ref, w1_ref, w2_ref, o_ref, *, inv_hw):
    # x_ref/o_ref: (Bt, C, HW) native dtype; w1_ref: (C, Crp); w2_ref: (Crp, C)
    pooled = _lane_sum_f32(x_ref) * inv_hw                                # (Bt, C)
    h = jnp.dot(pooled, w1_ref[...].astype(jnp.float32),
                preferred_element_type=jnp.float32)
    h = jnp.maximum(h, 0.0)
    s = jnp.dot(h, w2_ref[...].astype(jnp.float32),
                preferred_element_type=jnp.float32)
    s = jax.nn.sigmoid(s)                                                 # (Bt, C)
    # Fresh read of x_ref for the scale: keeps the store streaming and avoids a
    # long-lived whole-tile value across the reduce/matmul/sigmoid.
    o_ref[...] = x_ref[...] * s.astype(o_ref.dtype)[:, :, None]


def _ca_pool_kernel(x_ref, o_ref, *, tile, hw, needs_mask):
    # x_ref: (1, C, T); o_ref: (1, 1, 1, C) f32 partial sum for this tile.
    if needs_mask:
        col0 = pl.program_id(1) * tile
        pooled = _lane_sum_f32(x_ref, col0=col0, n_valid=hw)
    else:
        pooled = _lane_sum_f32(x_ref)
    o_ref[...] = pooled[:, None, None, :]


def _ca_scale_kernel(x_ref, s_ref, o_ref):
    # x_ref/o_ref: (1, C, T); s_ref: (1, 1, C) f32 per-channel scale.
    s = s_ref[...].astype(o_ref.dtype)            # (1, 1, C)
    o_ref[...] = x_ref[...] * s[:, 0, :, None]    # broadcast over the lane axis


# ----------------------------------------------------------------------------
# Wrappers
# ----------------------------------------------------------------------------

def _ca_fused(x, w1p, w2p, *, Bt, vmem_limit):
    B, C, HW = x.shape
    itemsize = jnp.dtype(x.dtype).itemsize
    Crp = w1p.shape[1]
    cost = pl.CostEstimate(
        flops=2 * B * C * HW + 4 * B * C * Crp,
        transcendentals=B * C,
        bytes_accessed=2 * B * C * HW * itemsize,
    )
    kernel = functools.partial(_ca_fused_kernel, inv_hw=1.0 / HW)
    return pl.pallas_call(
        kernel,
        out_shape=jax.ShapeDtypeStruct((B, C, HW), x.dtype),
        grid_spec=pltpu.PrefetchScalarGridSpec(
            num_scalar_prefetch=0,
            grid=(B // Bt,),
            in_specs=[
                pl.BlockSpec((Bt, C, HW), lambda b: (b, 0, 0)),
                pl.BlockSpec(w1p.shape, lambda b: (0, 0)),
                pl.BlockSpec(w2p.shape, lambda b: (0, 0)),
            ],
            out_specs=pl.BlockSpec((Bt, C, HW), lambda b: (b, 0, 0)),
        ),
        compiler_params=pltpu.CompilerParams(
            dimension_semantics=("parallel",),
            vmem_limit_bytes=int(vmem_limit),
        ),
        cost_estimate=cost,
    )(x, w1p, w2p)


def _ca_two_pass(x, w1, w2, *, target_block_bytes, budget_cap):
    B, C, HW = x.shape
    itemsize = jnp.dtype(x.dtype).itemsize

    # Lane tile: multiple of 128 and <= HW (so blocks never exceed the array),
    # or the full HW when HW < 128.
    if HW < 128:
        T = HW
    else:
        t_target = max(128, (target_block_bytes // max(C * itemsize, 1)) // 128 * 128)
        t_budget = max(128, ((budget_cap - (2 << 20)) // (4 * C * itemsize)) // 128 * 128)
        T = min(t_target, t_budget, (HW // 128) * 128)
    n_t = pl.cdiv(HW, T)
    needs_mask = (HW % T) != 0
    tile_bytes = C * T * itemsize
    vmem_limit = int(min(budget_cap, max(32 << 20, 4 * tile_bytes + (4 << 20))))

    # Pass 1: per-(sample, spatial-tile) partial channel sums; both grid axes parallel.
    cost1 = pl.CostEstimate(
        flops=B * C * HW, transcendentals=0,
        bytes_accessed=B * C * HW * itemsize + B * n_t * C * 4)
    psum = pl.pallas_call(
        functools.partial(_ca_pool_kernel, tile=T, hw=HW, needs_mask=needs_mask),
        out_shape=jax.ShapeDtypeStruct((B, n_t, 1, C), jnp.float32),
        grid_spec=pltpu.PrefetchScalarGridSpec(
            num_scalar_prefetch=0,
            grid=(B, n_t),
            in_specs=[pl.BlockSpec((1, C, T), lambda b, t: (b, 0, t))],
            out_specs=pl.BlockSpec((1, 1, 1, C), lambda b, t: (b, t, 0, 0)),
        ),
        compiler_params=pltpu.CompilerParams(
            dimension_semantics=("parallel", "parallel"),
            vmem_limit_bytes=vmem_limit,
        ),
        cost_estimate=cost1,
    )(x)

    # Tiny squeeze-excite on (B, C): plain JAX, negligible next to the big passes.
    pooled = jnp.sum(psum, axis=(1, 2)) * (1.0 / HW)                     # (B, C) f32
    h = jnp.maximum(pooled @ w1.astype(jnp.float32), 0.0)
    s = jax.nn.sigmoid(h @ w2.astype(jnp.float32))                       # (B, C) f32
    s3 = s.reshape(B, 1, C)

    # Pass 2: elementwise per-channel scale; both grid axes parallel.
    cost2 = pl.CostEstimate(
        flops=B * C * HW, transcendentals=0,
        bytes_accessed=2 * B * C * HW * itemsize + B * C * 4)
    return pl.pallas_call(
        _ca_scale_kernel,
        out_shape=jax.ShapeDtypeStruct((B, C, HW), x.dtype),
        grid_spec=pltpu.PrefetchScalarGridSpec(
            num_scalar_prefetch=0,
            grid=(B, n_t),
            in_specs=[
                pl.BlockSpec((1, C, T), lambda b, t: (b, 0, t)),
                pl.BlockSpec((1, 1, C), lambda b, t: (b, 0, 0)),
            ],
            out_specs=pl.BlockSpec((1, C, T), lambda b, t: (b, 0, t)),
        ),
        compiler_params=pltpu.CompilerParams(
            dimension_semantics=("parallel", "parallel"),
            vmem_limit_bytes=vmem_limit,
        ),
        cost_estimate=cost2,
    )(x, s3)


def ca_forward(x_nchw, w1, w2, *, target_block_bytes=None, force_two_pass=False):
    """Channel attention forward: out = x * sigmoid(conv2(relu(conv1(avgpool(x))))).

    x_nchw: (B, C, H, W)
    w1    : (C, Cr)  = PyTorch conv1 weight (Cr, C, 1, 1) squeezed & transposed
    w2    : (Cr, C)  = PyTorch conv2 weight (C, Cr, 1, 1) squeezed & transposed
    """
    B, C, H, W = x_nchw.shape
    HW = H * W
    itemsize = jnp.dtype(x_nchw.dtype).itemsize
    per_sample_bytes = C * HW * itemsize

    vmem_cap = _vmem_capacity_bytes()
    budget_cap = max(vmem_cap - (8 << 20), vmem_cap // 2)   # leave compiler headroom
    if target_block_bytes is None:
        # Bigger blocks on 128 MiB parts (v5e/v6e), smaller on 64 MiB v7x.
        target_block_bytes = (16 << 20) if vmem_cap >= (96 << 20) else (4 << 20)

    # NCHW -> (B, C, HW): contiguous reshape, no copy, no padding round-trips.
    x = x_nchw.reshape(B, C, HW)

    fused_fits = 4 * per_sample_bytes + (2 << 20) <= budget_cap
    use_two_pass = (force_two_pass or (not fused_fits)
                    or (B == 1 and per_sample_bytes >= (4 << 20)))

    if use_two_pass:
        out = _ca_two_pass(x, w1, w2, target_block_bytes=target_block_bytes,
                           budget_cap=budget_cap)
    else:
        w1p, w2p = _pad_se_weights(w1, w2)
        Bt = _pick_batch_tile(B, per_sample_bytes, target_block_bytes, budget_cap)
        w_bytes = (w1p.size + w2p.size) * jnp.dtype(w1p.dtype).itemsize
        block_bytes = Bt * per_sample_bytes
        vmem_limit = int(min(budget_cap,
                             max(32 << 20, 4 * block_bytes + w_bytes + (4 << 20))))
        out = _ca_fused(x, w1p, w2p, Bt=Bt, vmem_limit=vmem_limit)

    return out.reshape(B, C, H, W)


# ----------------------------------------------------------------------------
# Reference + self-test
# ----------------------------------------------------------------------------

def _reference(x, w1, w2):
    pooled = jnp.mean(x.astype(jnp.float32), axis=(2, 3))              # (B, C)
    h = jnp.maximum(pooled @ w1.astype(jnp.float32), 0.0)              # (B, Cr)
    s = jax.nn.sigmoid(h @ w2.astype(jnp.float32))                     # (B, C)
    return x * s[:, :, None, None].astype(x.dtype)


if __name__ == "__main__":
    key = jax.random.PRNGKey(0)

    def make_case(B, C, H, W, reduction, k):
        Cr = max(1, C // reduction)
        kx, k1, k2 = jax.random.split(k, 3)
        x = jax.random.normal(kx, (B, C, H, W), dtype=jnp.float32)
        b1 = 1.0 / (C ** 0.5)
        b2 = 1.0 / (Cr ** 0.5)
        w1 = jax.random.uniform(k1, (C, Cr), minval=-b1, maxval=b1, dtype=jnp.float32)
        w2 = jax.random.uniform(k2, (Cr, C), minval=-b2, maxval=b2, dtype=jnp.float32)
        return x, w1, w2

    ks = jax.random.split(key, 3)

    # 1) Fused path, 128-multiple spatial size (channel=32, reduction=16 -> Cr=2).
    x, w1, w2 = make_case(2, 32, 16, 16, 16, ks[0])
    out = jax.block_until_ready(ca_forward(x, w1, w2))
    assert out.shape == x.shape
    assert jnp.allclose(out, _reference(x, w1, w2), atol=1e-5, rtol=1e-5)

    # 2) Fused path, non-multiple-of-128 spatial size (no host-side padding).
    x, w1, w2 = make_case(2, 32, 10, 10, 16, ks[1])
    out = jax.block_until_ready(ca_forward(x, w1, w2))
    assert jnp.allclose(out, _reference(x, w1, w2), atol=1e-5, rtol=1e-5)

    # 3) Two-pass path (forced, small tile) with a ragged last spatial tile.
    x, w1, w2 = make_case(3, 32, 12, 12, 16, ks[2])
    out = jax.block_until_ready(
        ca_forward(x, w1, w2, target_block_bytes=16 * 1024, force_two_pass=True))
    assert jnp.allclose(out, _reference(x, w1, w2), atol=1e-5, rtol=1e-5)

    print("KERNEL_OK")
</pallas_src>

<mosaic_0001>
module attributes {stable_mosaic.version = 11 : i64} {
  func.func @_ca_fused_kernel(%arg0: i32, %arg1: memref<1x32x256xf32, #tpu.memory_space<vmem>>, %arg2: memref<32x128xf32, #tpu.memory_space<vmem>>, %arg3: memref<128x32xf32, #tpu.memory_space<vmem>>, %arg4: memref<1x32x256xf32, #tpu.memory_space<vmem>>) attributes {dimension_semantics = [#tpu.dimension_semantics<parallel>], iteration_bounds = array<i64: 2>, scalar_prefetch = 0 : i64, scratch_operands = 0 : i64, tpu.core_type = #tpu.core_type<tc>, window_params = [{transform_indices = @transform_0, window_bounds = array<i64: 1, 32, 256>}, {pipeline_mode = #tpu.pipeline_mode<synchronous>, transform_indices = @transform_1, window_bounds = array<i64: 32, 128>}, {pipeline_mode = #tpu.pipeline_mode<synchronous>, transform_indices = @transform_2, window_bounds = array<i64: 128, 32>}, {transform_indices = @transform_3, window_bounds = array<i64: 1, 32, 256>}]} {
    %c0 = arith.constant 0 : index
    %c0_0 = arith.constant 0 : index
    %c0_1 = arith.constant 0 : index
    %0 = vector.load %arg1[%c0, %c0_0, %c0_1] : memref<1x32x256xf32, #tpu.memory_space<vmem>>, vector<1x32x128xf32>
    %c0_2 = arith.constant 0 : index
    %c0_3 = arith.constant 0 : index
    %c128 = arith.constant 128 : index
    %1 = vector.load %arg1[%c0_2, %c0_3, %c128] : memref<1x32x256xf32, #tpu.memory_space<vmem>>, vector<1x32x128xf32>
    %2 = arith.addf %0, %1 : vector<1x32x128xf32>
    %cst = arith.constant dense<0.000000e+00> : vector<1x32xf32>
    %3 = vector.multi_reduction <add>, %2, %cst [2] : vector<1x32x128xf32> to vector<1x32xf32>
    %cst_4 = arith.constant 3.906250e-03 : f32
    %4 = vector.broadcast %cst_4 : f32 to vector<1x32xf32>
    %5 = arith.mulf %3, %4 : vector<1x32xf32>
    %c0_5 = arith.constant 0 : index
    %c0_6 = arith.constant 0 : index
    %6 = vector.load %arg2[%c0_5, %c0_6] : memref<32x128xf32, #tpu.memory_space<vmem>>, vector<32x128xf32>
    %cst_7 = arith.constant dense<0.000000e+00> : vector<1x128xf32>
    %7 = tpu.matmul %5, %6, %cst_7 {dimension_numbers = #tpu.dot_dimension_numbers<[1], [0], [0], [1], [0, 0, 1, 1], [], []>} : vector<1x32xf32>, vector<32x128xf32>, vector<1x128xf32> -> vector<1x128xf32>
    %cst_8 = arith.constant 0.000000e+00 : f32
    %8 = vector.broadcast %cst_8 : f32 to vector<1x128xf32>
    %9 = arith.maximumf %7, %8 : vector<1x128xf32>
    %c0_9 = arith.constant 0 : index
    %c0_10 = arith.constant 0 : index
    %10 = vector.load %arg3[%c0_9, %c0_10] : memref<128x32xf32, #tpu.memory_space<vmem>>, vector<128x32xf32>
    %cst_11 = arith.constant dense<0.000000e+00> : vector<1x32xf32>
    %11 = tpu.matmul %9, %10, %cst_11 {dimension_numbers = #tpu.dot_dimension_numbers<[1], [0], [0], [1], [0, 0, 1, 1], [], []>} : vector<1x128xf32>, vector<128x32xf32>, vector<1x32xf32> -> vector<1x32xf32>
    %12 = arith.negf %11 : vector<1x32xf32>
    %13 = math.exp %12 : vector<1x32xf32>
    %cst_12 = arith.constant 1.000000e+00 : f32
    %14 = vector.broadcast %cst_12 : f32 to vector<1x32xf32>
    %15 = arith.addf %14, %13 : vector<1x32xf32>
    %16 = arith.divf %14, %15 : vector<1x32xf32>
    %c0_13 = arith.constant 0 : index
    %c0_14 = arith.constant 0 : index
    %c0_15 = arith.constant 0 : index
    %17 = vector.load %arg1[%c0_13, %c0_14, %c0_15] : memref<1x32x256xf32, #tpu.memory_space<vmem>>, vector<1x32x256xf32>
    %18 = vector.shape_cast %16 : vector<1x32xf32> to vector<1x32x1xf32>
    %19 = vector.broadcast %18 : vector<1x32x1xf32> to vector<1x32x256xf32>
    %20 = arith.mulf %17, %19 : vector<1x32x256xf32>
    %c0_16 = arith.constant 0 : index
    %c0_17 = arith.constant 0 : index
    %c0_18 = arith.constant 0 : index
    %21 = vector.load %arg4[%c0_16, %c0_17, %c0_18] : memref<1x32x256xf32, #tpu.memory_space<vmem>>, vector<1x32x256xf32>
    tpu.vector_store %arg4[%c0_16, %c0_17, %c0_18], %20 {strides = array<i32>} : memref<1x32x256xf32, #tpu.memory_space<vmem>>, vector<1x32x256xf32>,
    return
  }
  func.func @transform_0(%arg0: i32) -> (i32, i32, i32) {
    %c0_i32 = arith.constant 0 : i32
    %c0_i32_0 = arith.constant 0 : i32
    %c0_i32_1 = arith.constant 0 : i32
    return %arg0, %c0_i32, %c0_i32_0 : i32, i32, i32
  }
  func.func @transform_1(%arg0: i32) -> (i32, i32) {
    %c0_i32 = arith.constant 0 : i32
    %c0_i32_0 = arith.constant 0 : i32
    %c0_i32_1 = arith.constant 0 : i32
    return %c0_i32, %c0_i32_0 : i32, i32
  }
  func.func @transform_2(%arg0: i32) -> (i32, i32) {
    %c0_i32 = arith.constant 0 : i32
    %c0_i32_0 = arith.constant 0 : i32
    %c0_i32_1 = arith.constant 0 : i32
    return %c0_i32, %c0_i32_0 : i32, i32
  }
  func.func @transform_3(%arg0: i32) -> (i32, i32, i32) {
    %c0_i32 = arith.constant 0 : i32
    %c0_i32_0 = arith.constant 0 : i32
    %c0_i32_1 = arith.constant 0 : i32
    return %arg0, %c0_i32, %c0_i32_0 : i32, i32, i32
  }
}

</mosaic_0001>

<llo_original>
// kernel: tpu_custom_call.1
$region0: #{tpu_custom_call.1}
  #allocation0 [shape = 'u32[]', space=smem, size = 0x4, offset = 0x4, fixed_abs, tag = 'smem constant byte address 0x4 - core index']
  #allocation1 [shape = 'u32[144,128]{1,0:T(1,128)}', space=vmem, size = 0x12000, scoped, tag = 'internal scratch']
  %s0 = inlined_call_operand.vmem [shape: f32[2,32,256], index: 0, kind: input, shape index: {}]
  %s1 = inlined_call_operand.vmem [shape: f32[32,128], index: 1, kind: input, shape index: {}]
  %s2 = inlined_call_operand.vmem [shape: f32[128,32], index: 2, kind: input, shape index: {}]
  %s3 = inlined_call_operand.hbm [shape: f32[2,32,256], index: 3, kind: output, shape index: {}]
  %s4 = sld [smem:[#allocation0]]
  $region45: #{tpu_custom_call.1} parent=0
    _
  %s6 = ssub.s32 1, %s4
  %s7 = scalar_select 0, %s6, %s4
  $region1: #{tpu_custom_call.1} parent=0
    #allocation2 [shape = 'u8[65536]{0}', space=vmem, size = 0x10000, scoped, tag = 'output window, operand 0']
    #allocation3 [shape = 's32[2]{0}', space=sflag, size = 0x8, scoped, tag = 'scoped memory for tpu_custom_call.1']
    %8 = vsyncpa [#allocation3], 0
    %s9 = scalar_lea.sflag [#allocation3], 1
    %10 = vsyncpa %s9, 0
    loop: start=0, step=1, limit=4
    $region2: #{tpu_custom_call.1} parent=1 // loop_pre_header
      _
    $region3: #{tpu_custom_call.1} parent=1 // loop_header
      %s12 = sphi 0, %s16
      %p13 = scmp.ge.s32.totalorder %s12, 4
      %s22 = sphi 0, %s24
      %s25 = sphi 0, %s22
      %s26 = sphi 0, %s25
      %s42 = sphi 0, %s26
      %s46 = sphi 0, %s46
      %s48 = sphi 0, %s46
      %s49 = sphi 0, %s48
      %s63 = sphi 0, %s49
      %s67 = sphi 0, %s67
      %s69 = sphi 0, %s67
      %s70 = sphi 0, %s69
      %s84 = sphi 0, %s70
      %s90 = sphi 0, %s92
      %s93 = sphi 0, %s90
      %s94 = sphi 0, %s93
      %s110 = sphi 0, %s94
    $region4: #{tpu_custom_call.1} parent=1 // loop_header_branch
      %15 = sbr.rel (%p13) target = $region8
    $region5: #{tpu_custom_call.1} parent=1 // loop_body
      %s17 = ssub.s32 %s12, 1
      %s18 = ssub.s32 %s12, 2
      %s19 = sadd.s32 %s12, 1
      %s20 = ssub.s32 %s12, %s19
      %p21 = scmp.eq.s32.totalorder %s20, 0
      %s23 = sadd.s32 %s22, 1
      %s24 = scalar_select %p21, %s22, %s23
      %p27 = pneg %p21
      %p28 = scmp.eq.s32.totalorder %s12, 1
      %p29 = por %p27, %p28
      %p30 = scmp.ne.s32.totalorder %s22, %s25
      %p31 = scmp.eq.s32.totalorder %s12, 0
      %p32 = por %p30, %p31
      %p33 = scmp.ne.s32.totalorder %s22, %s25
      %p34 = scmp.eq.s32.totalorder %s17, 1
      %p35 = por %p33, %p34
      %p36 = scmp.ne.s32.totalorder %s25, %s26
      %p37 = scmp.eq.s32.totalorder %s17, 0
      %p38 = por %p36, %p37
      %p39 = scmp.ne.s32.totalorder %s25, %s26
      %p40 = scmp.eq.s32.totalorder %s18, 1
      %p41 = por %p39, %p40
      %p43 = scmp.ne.s32.totalorder %s26, %s42
      %p44 = scmp.eq.s32.totalorder %s18, 0
      %p45 = por %p43, %p44
      %s47 = sadd.s32 %s46, 1
      %p50 = scmp.eq.s32.totalorder %s12, 1
      %p51 = scmp.ne.s32.totalorder %s46, %s48
      %p52 = scmp.eq.s32.totalorder %s12, 0
      %p53 = por %p51, %p52
      %p54 = scmp.ne.s32.totalorder %s46, %s48
      %p55 = scmp.eq.s32.totalorder %s17, 1
      %p56 = por %p54, %p55
      %p57 = scmp.ne.s32.totalorder %s48, %s49
      %p58 = scmp.eq.s32.totalorder %s17, 0
      %p59 = por %p57, %p58
      %p60 = scmp.ne.s32.totalorder %s48, %s49
      %p61 = scmp.eq.s32.totalorder %s18, 1
      %p62 = por %p60, %p61
      %p64 = scmp.ne.s32.totalorder %s49, %s63
      %p65 = scmp.eq.s32.totalorder %s18, 0
      %p66 = por %p64, %p65
      %s68 = sadd.s32 %s67, 1
      %p71 = scmp.eq.s32.totalorder %s12, 1
      %p72 = scmp.ne.s32.totalorder %s67, %s69
      %p73 = scmp.eq.s32.totalorder %s12, 0
      %p74 = por %p72, %p73
      %p75 = scmp.ne.s32.totalorder %s67, %s69
      %p76 = scmp.eq.s32.totalorder %s17, 1
      %p77 = por %p75, %p76
      %p78 = scmp.ne.s32.totalorder %s69, %s70
      %p79 = scmp.eq.s32.totalorder %s17, 0
      %p80 = por %p78, %p79
      %p81 = scmp.ne.s32.totalorder %s69, %s70
      %p82 = scmp.eq.s32.totalorder %s18, 1
      %p83 = por %p81, %p82
      %p85 = scmp.ne.s32.totalorder %s70, %s84
      %p86 = scmp.eq.s32.totalorder %s18, 0
      %p87 = por %p85, %p86
      %s88 = ssub.s32 %s12, %s19
      %p89 = scmp.eq.s32.totalorder %s88, 0
      %s91 = sadd.s32 %s90, 1
      %s92 = scalar_select %p89, %s90, %s91
      %p95 = pneg %p89
      %p96 = scmp.eq.s32.totalorder %s12, 1
      %p97 = por %p95, %p96
      %p98 = scmp.ne.s32.totalorder %s90, %s93
      %p99 = scmp.eq.s32.totalorder %s12, 0
      %p100 = por %p98, %p99
      %p101 = scmp.ne.s32.totalorder %s90, %s93
      %p102 = scmp.eq.s32.totalorder %s17, 1
      %p103 = por %p101, %p102
      %p104 = scmp.ne.s32.totalorder %s93, %s94
      %p105 = scmp.eq.s32.totalorder %s17, 0
      %p106 = por %p104, %p105
      %p107 = scmp.ne.s32.totalorder %s93, %s94
      %p108 = scmp.eq.s32.totalorder %s18, 1
      %p109 = por %p107, %p108
      %p111 = scmp.ne.s32.totalorder %s94, %s110
      %p112 = scmp.eq.s32.totalorder %s18, 0
      %p113 = por %p111, %p112
      %p114 = scmp.le.s32.totalorder 1, %s12
      %p115 = scmp.lt.s32.totalorder %s12, 3
      %p116 = pnand %p114, %p115
      %p117 = pneg %p116
      // Predicated region
      $region9: #{tpu_custom_call.1} parent=5 // pred_check
        _
      $region10: #{tpu_custom_call.1} parent=5 // pred_check_branch
        %119 = sbr.rel (%p116) target = $region12
      $region11: #{tpu_custom_call.1} parent=5 // pred_region
        %s120 = ssub.s32 %s12, 1
        // Predicated region
        $region13: #{tpu_custom_call.1} parent=11 // pred_check
          %p121 = pneg %p59
        $region14: #{tpu_custom_call.1} parent=11 // pred_check_branch
          %123 = sbr.rel (%p121) target = $region16
        $region15: #{tpu_custom_call.1} parent=11 // pred_region
          _
        $region16: #{tpu_custom_call.1} parent=11 // pred_fallthru
          _
        // Predicated region
        $region17: #{tpu_custom_call.1} parent=11 // pred_check
          %p124 = pneg %p80
        $region18: #{tpu_custom_call.1} parent=11 // pred_check_branch
          %126 = sbr.rel (%p124) target = $region20
        $region19: #{tpu_custom_call.1} parent=11 // pred_region
          _
        $region20: #{tpu_custom_call.1} parent=11 // pred_fallthru
          _
      $region12: #{tpu_custom_call.1} parent=5 // pred_fallthru
        _
      %p127 = scmp.lt.s32.totalorder %s12, 2
      // Predicated region
      $region21: #{tpu_custom_call.1} parent=5 // pred_check
        %p128 = pneg %p127
      $region22: #{tpu_custom_call.1} parent=5 // pred_check_branch
        %130 = sbr.rel (%p128) target = $region24
      $region23: #{tpu_custom_call.1} parent=5 // pred_region
        // Predicated region
        $region25: #{tpu_custom_call.1} parent=23 // pred_check
          %p131 = pneg %p32
        $region26: #{tpu_custom_call.1} parent=23 // pred_check_branch
          %133 = sbr.rel (%p131) target = $region28
        $region27: #{tpu_custom_call.1} parent=23 // pred_region
          %p134 = scmp.lt.s32.totalorder %s12, 1
          %s135 = scalar_select %p134, %s12, 1
          %s136 = smul.addr %s135, 8
          %s137 = smul.addr %s136, 8
          %s138 = scalar_lea.vmem %s0, %s137
        $region28: #{tpu_custom_call.1} parent=23 // pred_fallthru
          _
      $region24: #{tpu_custom_call.1} parent=5 // pred_fallthru
        _
      %p139 = scmp.le.s32.totalorder 1, %s12
      %p140 = scmp.lt.s32.totalorder %s12, 3
      %p141 = pnand %p139, %p140
      %p142 = pneg %p141
      // Predicated region
      $region29: #{tpu_custom_call.1} parent=5 // pred_check
        _
      $region30: #{tpu_custom_call.1} parent=5 // pred_check_branch
        %144 = sbr.rel (%p141) target = $region32
      $region31: #{tpu_custom_call.1} parent=5 // pred_region
        %s145 = ssub.s32 %s12, 1
        %p146 = scmp.lt.s32.totalorder %s17, 1
        %s147 = scalar_select %p146, %s17, 1
        %s148 = smul.addr %s147, 8
        %s149 = smul.addr %s148, 8
        %s150 = scalar_lea.vmem %s0, %s149
        %p151 = pneg %p38
        %p152 = pneg %p35
        %p153 = pneg %p59
        %p154 = pneg %p56
        %p155 = pneg %p80
        %p156 = pneg %p77
        %p157 = pneg %p106
        %p158 = pneg %p103
        %s159 = sand.u32 %s93, 1
        %s160 = scalar_lea.sflag [#allocation3], %s159
        %s161 = sand.u32 %s93, 1
        %s162 = smul.addr %s161, 64
        %s163 = scalar_lea.vmem [#allocation2], %s162
        %p164 = scmp.lt.s32.totalorder %s17, 1
        %s165 = scalar_select %p164, %s17, 1
        %s166 = smul.addr %s165, 8
        %s167 = smul.addr %s166, 8
        %s168 = scalar_lea.vmem %s0, %s167
        %v169 = vld [vmem:[%s168] sm:$0xff]
        %v170 = vld [vmem:[%s168 + $0x10] sm:$0xff]
        %v171 = vld [vmem:[%s168 + $0x20] sm:$0xff]
        %v172 = vld [vmem:[%s168 + $0x30] sm:$0xff]
        %v173 = vld [vmem:[%s168 + $0x8] sm:$0xff]
        %v174 = vld [vmem:[%s168 + $0x18] sm:$0xff]
        %v175 = vld [vmem:[%s168 + $0x28] sm:$0xff]
        %v176 = vld [vmem:[%s168 + $0x38] sm:$0xff]
        %v177 = vadd.f32 %v169, %v173
        %v178 = vadd.f32 %v170, %v174
        %v179 = vadd.f32 %v171, %v175
        %v180 = vadd.f32 %v172, %v176
        %181 = vadd.xlane.f32.xlu0 %v177
        %v182 = vpop.xlane.xlu0 %181
        %183 = vadd.xlane.f32.xlu0 %v178
        %v184 = vpop.xlane.xlu0 %183
        %185 = vadd.xlane.f32.xlu0 %v179
        %v186 = vpop.xlane.xlu0 %185
        %187 = vadd.xlane.f32.xlu0 %v180
        %v188 = vpop.xlane.xlu0 %187
        %v189 = vmul.f32 %v182, 0.00390625
        %v190 = vmul.f32 %v184, 0.00390625
        %v191 = vmul.f32 %v186, 0.00390625
        %v192 = vmul.f32 %v188, 0.00390625
        %v193 = vld [vmem:[%s1] sm:$0xff]
        %v194 = vld [vmem:[%s1 + $0x8] sm:$0xff]
        %v195 = vld [vmem:[%s1 + $0x10] sm:$0xff]
        %v196 = vld [vmem:[%s1 + $0x18] sm:$0xff]
        %v201 = vlaneseq
        %v202 = vand.u32 %v201, 127
        %v203 = vlaneseq
        %v204 = vshrl.u32 %v203, 7
        %v205 = vsub.s32 %v202, %v204
        %v206 = vrot.slane %v189, %v205
        %v207 = vadd.s32 %v202, 4294967288
        %v208 = vlaneseq
        %v209 = vshrl.u32 %v208, 7
        %v210 = vsub.s32 %v207, %v209
        %v211 = vrot.slane %v190, %v210
        %vm212 = vcmask 130112
        %v213 = vsel %vm212, %v211, %v206
        %v214 = vadd.s32 %v202, 4294967280
        %v215 = vlaneseq
        %v216 = vshrl.u32 %v215, 7
        %v217 = vsub.s32 %v214, %v216
        %v218 = vrot.slane %v191, %v217
        %vm219 = vcmask 195712
        %v220 = vsel %vm219, %v218, %v213
        %v221 = vadd.s32 %v202, 4294967272
        %v222 = vlaneseq
        %v223 = vshrl.u32 %v222, 7
        %v224 = vsub.s32 %v221, %v223
        %v225 = vrot.slane %v192, %v224
        %vm226 = vcmask 261312
        %v227 = vsel %vm226, %v225, %v220
        %vm228 = vcmask 261120
        %v229 = vsel %vm228, %v227, 0
        %231 = vmatprep.subr.mxu0 0.0
        %232 = vmatpush1.msra.mxu0 %v193
        %233 = vmatprep.subr.mxu0 0.0
        %234 = vmatpush1.msra.mxu0 %v194
        %235 = vmatprep.subr.mxu0 0.0
        %236 = vmatpush1.msra.mxu0 %v195
        %237 = vmatprep.subr.mxu0 0.0
        %238 = vmatpush1.msra.mxu0 %v196
        %239 = vmatprep.subr.mxu0 0.0
        %240 = vmatpush1.msra.mxu0 0.0
        %241 = vmatprep.subr.mxu0 0.0
        %242 = vmatpush1.msra.mxu0 0.0
        %243 = vmatprep.subr.mxu0 0.0
        %244 = vmatpush1.msra.mxu0 0.0
        %245 = vmatprep.subr.mxu0 0.0
        %246 = vmatpush1.msra.mxu0 0.0
        %247 = vmatprep.subr.mxu0 0.0
        %248 = vmatpush1.msra.mxu0 0.0
        %249 = vmatprep.subr.mxu0 0.0
        %250 = vmatpush1.msra.mxu0 0.0
        %251 = vmatprep.subr.mxu0 0.0
        %252 = vmatpush1.msra.mxu0 0.0
        %253 = vmatprep.subr.mxu0 0.0
        %254 = vmatpush1.msra.mxu0 0.0
        %255 = vmatprep.subr.mxu0 0.0
        %256 = vmatpush1.msra.mxu0 0.0
        %257 = vmatprep.subr.mxu0 0.0
        %258 = vmatpush1.msra.mxu0 0.0
        %259 = vmatprep.subr.mxu0 0.0
        %260 = vmatpush1.msra.mxu0 0.0
        %261 = vmatprep.subr.mxu0 0.0
        %262 = vmatpush1.msra.mxu0 0.0
        %263 = vmatprep.subr.mxu0 0.0
        %264 = vmatpush1.msra.mxu0 0.0
        %265 = vmatprep.subr.mxu0 0.0
        %266 = vmatpush1.msra.mxu0 0.0
        %267 = vmatprep.subr.mxu0 0.0
        %268 = vmatpush1.msra.mxu0 0.0
        %269 = vmatprep.subr.mxu0 0.0
        %270 = vmatpush1.msra.mxu0 0.0
        %271 = vmatprep.subr.mxu0 0.0
        %272 = vmatpush1.msra.mxu0 0.0
        %273 = vmatprep.subr.mxu0 0.0
        %274 = vmatpush1.msra.mxu0 0.0
        %275 = vmatprep.subr.mxu0 0.0
        %276 = vmatpush1.msra.mxu0 0.0
        %277 = vmatprep.subr.mxu0 0.0
        %278 = vmatpush1.msra.mxu0 0.0
        %279 = vmatprep.subr.mxu0 0.0
        %280 = vmatpush1.msra.mxu0 0.0
        %281 = vmatprep.subr.mxu0 0.0
        %282 = vmatpush1.msra.mxu0 0.0
        %283 = vmatprep.subr.mxu0 0.0
        %284 = vmatpush1.msra.mxu0 0.0
        %285 = vmatprep.subr.mxu0 0.0
        %286 = vmatpush1.msra.mxu0 0.0
        %287 = vmatprep.subr.mxu0 0.0
        %288 = vmatpush1.msra.mxu0 0.0
        %289 = vmatprep.subr.mxu0 0.0
        %290 = vmatpush1.msra.mxu0 0.0
        %291 = vmatprep.subr.mxu0 0.0
        %292 = vmatpush1.msra.mxu0 0.0
        %293 = vmatprep.subr.mxu0 0.0
        %294 = vmatpush1.msra.mxu0 0.0
        %295 = vmatprep.mubr.f32.mxu0 0.0
        %296 = vmatmul.mubr.f32.gmra.mrb[0].mxu0 %v229
        %v297 = vpop.f32.mrb[0].mxu0
        %v298 = vadd.f32 0.0, %v297
        %v299 = vpop.f32.mrb[0].mxu0
        %300 = vdwg.mxu0
        %v301 = vmax.f32 %v298, 0.0
        %v302 = vld [vmem:[%s2] sm:$0xff]
        %v303 = vld [vmem:[%s2 + $0x8] sm:$0xff]
        %v304 = vld [vmem:[%s2 + $0x10] sm:$0xff]
        %v305 = vld [vmem:[%s2 + $0x18] sm:$0xff]
        %v306 = vld [vmem:[%s2 + $0x20] sm:$0xff]
        %v307 = vld [vmem:[%s2 + $0x28] sm:$0xff]
        %v308 = vld [vmem:[%s2 + $0x30] sm:$0xff]
        %v309 = vld [vmem:[%s2 + $0x38] sm:$0xff]
        %v310 = vld [vmem:[%s2 + $0x40] sm:$0xff]
        %v311 = vld [vmem:[%s2 + $0x48] sm:$0xff]
        %v312 = vld [vmem:[%s2 + $0x50] sm:$0xff]
        %v313 = vld [vmem:[%s2 + $0x58] sm:$0xff]
        %v314 = vld [vmem:[%s2 + $0x60] sm:$0xff]
        %v315 = vld [vmem:[%s2 + $0x68] sm:$0xff]
        %v316 = vld [vmem:[%s2 + $0x70] sm:$0xff]
        %v317 = vld [vmem:[%s2 + $0x78] sm:$0xff]
        %318 = vmatprep.subr.mxu0 0.0
        %319 = vmatpush1.msra.mxu0 %v302
        %320 = vmatprep.subr.mxu0 0.0
        %321 = vmatpush1.msra.mxu0 %v303
        %322 = vmatprep.subr.mxu0 0.0
        %323 = vmatpush1.msra.mxu0 %v304
        %324 = vmatprep.subr.mxu0 0.0
        %325 = vmatpush1.msra.mxu0 %v305
        %326 = vmatprep.subr.mxu0 0.0
        %327 = vmatpush1.msra.mxu0 %v306
        %328 = vmatprep.subr.mxu0 0.0
        %329 = vmatpush1.msra.mxu0 %v307
        %330 = vmatprep.subr.mxu0 0.0
        %331 = vmatpush1.msra.mxu0 %v308
        %332 = vmatprep.subr.mxu0 0.0
        %333 = vmatpush1.msra.mxu0 %v309
        %334 = vmatprep.subr.mxu0 0.0
        %335 = vmatpush1.msra.mxu0 %v310
        %336 = vmatprep.subr.mxu0 0.0
        %337 = vmatpush1.msra.mxu0 %v311
        %338 = vmatprep.subr.mxu0 0.0
        %339 = vmatpush1.msra.mxu0 %v312
        %340 = vmatprep.subr.mxu0 0.0
        %341 = vmatpush1.msra.mxu0 %v313
        %342 = vmatprep.subr.mxu0 0.0
        %343 = vmatpush1.msra.mxu0 %v314
        %344 = vmatprep.subr.mxu0 0.0
        %345 = vmatpush1.msra.mxu0 %v315
        %346 = vmatprep.subr.mxu0 0.0
        %347 = vmatpush1.msra.mxu0 %v316
        %348 = vmatprep.subr.mxu0 0.0
        %349 = vmatpush1.msra.mxu0 %v317
        %350 = vmatprep.subr.mxu0 0.0
        %351 = vmatpush1.msra.mxu0 0.0
        %352 = vmatprep.subr.mxu0 0.0
        %353 = vmatpush1.msra.mxu0 0.0
        %354 = vmatprep.subr.mxu0 0.0
        %355 = vmatpush1.msra.mxu0 0.0
        %356 = vmatprep.subr.mxu0 0.0
        %357 = vmatpush1.msra.mxu0 0.0
        %358 = vmatprep.subr.mxu0 0.0
        %359 = vmatpush1.msra.mxu0 0.0
        %360 = vmatprep.subr.mxu0 0.0
        %361 = vmatpush1.msra.mxu0 0.0
        %362 = vmatprep.subr.mxu0 0.0
        %363 = vmatpush1.msra.mxu0 0.0
        %364 = vmatprep.subr.mxu0 0.0
        %365 = vmatpush1.msra.mxu0 0.0
        %366 = vmatprep.subr.mxu0 0.0
        %367 = vmatpush1.msra.mxu0 0.0
        %368 = vmatprep.subr.mxu0 0.0
        %369 = vmatpush1.msra.mxu0 0.0
        %370 = vmatprep.subr.mxu0 0.0
        %371 = vmatpush1.msra.mxu0 0.0
        %372 = vmatprep.subr.mxu0 0.0
        %373 = vmatpush1.msra.mxu0 0.0
        %374 = vmatprep.subr.mxu0 0.0
        %375 = vmatpush1.msra.mxu0 0.0
        %376 = vmatprep.subr.mxu0 0.0
        %377 = vmatpush1.msra.mxu0 0.0
        %378 = vmatprep.subr.mxu0 0.0
        %379 = vmatpush1.msra.mxu0 0.0
        %380 = vmatprep.subr.mxu0 0.0
        %381 = vmatpush1.msra.mxu0 0.0
        %382 = vmatprep.mubr.f32.mxu0 0.0
        %383 = vmatmul.mubr.f32.gmra.mrb[0].mxu0 %v301
        %v384 = vpop.f32.mrb[0].mxu0
        %v385 = vadd.f32 0.0, %v384
        %v386 = vpop.f32.mrb[0].mxu0
        %387 = vdwg.mxu0
        %v388 = vxor.u32 %v385, 2147483648
        %v389 = vmul.f32 %v388, 1.442695
        %v390 = vpow.pop %v389
        %v391 = vadd.f32 %v390, 1.0
        %v392 = vrcp.pop %v391
        %v393 = vmul.f32 1.0, %v392
        %v394 = vld [vmem:[%s168] sm:$0xff]
        %v395 = vld [vmem:[%s168 + $0x10] sm:$0xff]
        %v396 = vld [vmem:[%s168 + $0x20] sm:$0xff]
        %v397 = vld [vmem:[%s168 + $0x30] sm:$0xff]
        %v398 = vlaneseq
        %v399 = vshrl.u32 %v398, 7
        %v400 = vsub.s32 0, %v399
        %v401 = vrot.slane %v393, %v400
        %403 = vbcast.lane.b32.xlu0 %v401, 256
        %v404 = vpop.permute.xlu0 %403
        %s406 = sor.u32 256, 8
        %407 = vbcast.lane.b32.xlu0 %v401, %s406
        %v408 = vpop.permute.xlu0 %407
        %s410 = sor.u32 256, 16
        %411 = vbcast.lane.b32.xlu0 %v401, %s410
        %v412 = vpop.permute.xlu0 %411
        %s414 = sor.u32 256, 24
        %415 = vbcast.lane.b32.xlu0 %v401, %s414
        %v416 = vpop.permute.xlu0 %415
        %v417 = vmul.f32 %v394, %v404
        %v418 = vmul.f32 %v173, %v404
        %v419 = vmul.f32 %v395, %v408
        %v420 = vmul.f32 %v174, %v408
        %v421 = vmul.f32 %v396, %v412
        %v422 = vmul.f32 %v175, %v412
        %v423 = vmul.f32 %v397, %v416
        %v424 = vmul.f32 %v176, %v416
        %425 = vst [vmem:[%s163] sm:$0xff] %v417
        %426 = vst [vmem:[%s163 + $0x8] sm:$0xff] %v418
        %427 = vst [vmem:[%s163 + $0x10] sm:$0xff] %v419
        %428 = vst [vmem:[%s163 + $0x18] sm:$0xff] %v420
        %429 = vst [vmem:[%s163 + $0x20] sm:$0xff] %v421
        %430 = vst [vmem:[%s163 + $0x28] sm:$0xff] %v422
        %431 = vst [vmem:[%s163 + $0x30] sm:$0xff] %v423
        %432 = vst [vmem:[%s163 + $0x38] sm:$0xff] %v424
        %s433 = sand.u32 %s93, 1
        %s434 = scalar_lea.sflag [#allocation3], %s433
        %s435 = sand.u32 %s93, 1
        %s436 = smul.addr %s435, 64
        %s437 = scalar_lea.vmem [#allocation2], %s436
        // Predicated region
        $region33: #{tpu_custom_call.1} parent=31 // pred_check
          %p438 = pneg %p103
        $region34: #{tpu_custom_call.1} parent=31 // pred_check_branch
          %440 = sbr.rel (%p438) target = $region36
        $region35: #{tpu_custom_call.1} parent=31 // pred_region
          %s442 = ssub.s32 1024, 1024
          %443 = vsyncadd %s434, %s442
          %s444 = smul.addr %s17, 8
          %s445 = smul.addr %s444, 128
          %s446 = scalar_lea.hbm %s3, %s445
          %s447 = sshll.u32 %s437, 4
          %s448 = int_to_ptr.vmem [resolvable:$true] %s447
          %453 = dma.vmem_to_hbm [thread:$0]  %s448, 1024, %s446, %s434, 256, 256, 16
        $region36: #{tpu_custom_call.1} parent=31 // pred_fallthru
          _
      $region32: #{tpu_custom_call.1} parent=5 // pred_fallthru
        _
      %p454 = scmp.le.s32.totalorder 2, %s12
      // Predicated region
      $region37: #{tpu_custom_call.1} parent=5 // pred_check
        %p455 = pneg %p454
      $region38: #{tpu_custom_call.1} parent=5 // pred_check_branch
        %457 = sbr.rel (%p455) target = $region40
      $region39: #{tpu_custom_call.1} parent=5 // pred_region
        %s458 = ssub.s32 %s12, 2
        // Predicated region
        $region41: #{tpu_custom_call.1} parent=39 // pred_check
          %p459 = pneg %p109
        $region42: #{tpu_custom_call.1} parent=39 // pred_check_branch
          %461 = sbr.rel (%p459) target = $region44
        $region43: #{tpu_custom_call.1} parent=39 // pred_region
          %s462 = sand.u32 %s94, 1
          %s463 = scalar_lea.sflag [#allocation3], %s462
          %s464 = sand.u32 %s94, 1
          %s465 = smul.addr %s464, 64
          %s466 = scalar_lea.vmem [#allocation2], %s465
          %467 = dma.done %s463, 1024
        $region44: #{tpu_custom_call.1} parent=39 // pred_fallthru
          _
      $region40: #{tpu_custom_call.1} parent=5 // pred_fallthru
        _
    $region6: #{tpu_custom_call.1} parent=1 // loop_footer
      %s16 = sadd.s32 1, %s12
    $region7: #{tpu_custom_call.1} parent=1 // loop_footer_branch
      %11 = sbr.rel target = $region3
    $region8: #{tpu_custom_call.1} parent=1 // loop_exit
      _
    %468 = vsyncpa [#allocation3], 1
    %s469 = scalar_lea.sflag [#allocation3], 1
    %470 = vsyncpa %s469, 1

</llo_original>
